<compile_context>
chip_gen: v6e
topology: v6e:2x2x1
jax: 0.10.0
libtpu: 0.0.40
codegen_flags: <defaults>
</compile_context>

<pallas_src>
import math

import jax
import jax.numpy as jnp
from jax.experimental import pallas as pl
from jax.experimental.pallas import tpu as pltpu


def _round_up(x, m):
    return ((x + m - 1) // m) * m


def actor_kernel(x_ref, w1_ref, b1_ref, w2_ref, b2_ref, w3_ref, b3_ref, o_ref):
    x = x_ref[...]

    # Linear(input_size, 20) + ReLU
    h1 = jnp.dot(x, w1_ref[...], preferred_element_type=jnp.float32) + b1_ref[...]
    h1 = jnp.maximum(h1, 0.0)

    # Linear(20, 10) + ReLU
    h2 = jnp.dot(h1, w2_ref[...], preferred_element_type=jnp.float32) + b2_ref[...]
    h2 = jnp.maximum(h2, 0.0)

    # Linear(10, action_size)
    logits = jnp.dot(h2, w3_ref[...], preferred_element_type=jnp.float32) + b3_ref[...]

    # Softmax(dim=-1), numerically stable. Exact divide (approx reciprocal was
    # not accurate enough to keep row sums within tolerance).
    m = jnp.max(logits, axis=-1, keepdims=True)
    e = jnp.exp(logits - m)
    denom = jnp.sum(e, axis=-1, keepdims=True)
    o_ref[...] = e / denom


def actor_forward(state, params, *, block_batch=8192):
    """Forward pass of the Actor. state: (batch, input_size) f32 -> (batch, action_size) f32."""
    w1, b1, w2, b2, w3, b3 = params
    batch, input_size = state.shape
    action_size = w3.shape[1]

    # Batch tile: multiple of 8 sublanes. Big default amortizes per-grid-step
    # overhead; cap keeps double-buffered in/out activation buffers ~<8 MiB so
    # the default scoped-VMEM limit is fine on all generations (v5e included).
    row_bytes = 4 * (input_size + action_size)
    vmem_row_cap = max(8, (((8 * 1024 * 1024) // (2 * row_bytes)) // 8) * 8)
    tb = min(_round_up(block_batch, 8), _round_up(batch, 8), vmem_row_cap)

    grid = (pl.cdiv(batch, tb),)  # ragged last tile handled by Pallas masking

    def resident(shape):
        # Weights/biases: single full block, constant index_map -> DMA'd once, VMEM-resident.
        return pl.BlockSpec(shape, lambda i: (0, 0))

    out = pl.pallas_call(
        actor_kernel,
        out_shape=jax.ShapeDtypeStruct((batch, action_size), jnp.float32),
        grid=grid,
        in_specs=[
            pl.BlockSpec((tb, input_size), lambda i: (i, 0)),  # state tiles over batch
            resident(w1.shape),
            resident(b1.shape),
            resident(w2.shape),
            resident(b2.shape),
            resident(w3.shape),
            resident(b3.shape),
        ],
        # Compact output: last-dim block equals the full array dim (legal even if < 128).
        # Stores become masked, but HBM bytes written drop ~21x vs a 128-padded output.
        out_specs=pl.BlockSpec((tb, action_size), lambda i: (i, 0)),
        compiler_params=pltpu.CompilerParams(
            dimension_semantics=("parallel",),  # v7x: shard batch tiles across both TCs
        ),
    )(state, w1, b1, w2, b2, w3, b3)

    return out


def xavier_uniform(key, fan_in, fan_out):
    # Matches torch.nn.init.xavier_uniform_ (gain=1): U(-a, a), a = sqrt(6/(fan_in+fan_out))
    bound = math.sqrt(6.0 / (fan_in + fan_out))
    return jax.random.uniform(
        key, (fan_in, fan_out), minval=-bound, maxval=bound, dtype=jnp.float32
    )


def init_actor_params(key, input_size, action_size):
    k1, k2, k3 = jax.random.split(key, 3)
    w1 = xavier_uniform(k1, input_size, 20)
    b1 = jnp.zeros((1, 20), jnp.float32)
    w2 = xavier_uniform(k2, 20, 10)
    b2 = jnp.zeros((1, 10), jnp.float32)
    w3 = xavier_uniform(k3, 10, action_size)
    b3 = jnp.zeros((1, action_size), jnp.float32)
    return (w1, b1, w2, b2, w3, b3)


def actor_reference(state, params):
    # Pure-JAX reference for correctness checking.
    w1, b1, w2, b2, w3, b3 = params
    h1 = jnp.maximum(state @ w1 + b1, 0.0)
    h2 = jnp.maximum(h1 @ w2 + b2, 0.0)
    logits = h2 @ w3 + b3
    return jax.nn.softmax(logits, axis=-1)


if __name__ == "__main__":
    key = jax.random.PRNGKey(0)
    k_params, k_state = jax.random.split(key)

    batch = 40          # deliberately not a multiple of the batch tile (ragged last tile)
    input_size = 32
    action_size = 6

    params = init_actor_params(k_params, input_size, action_size)
    state = jax.random.normal(k_state, (batch, input_size), dtype=jnp.float32)

    # Small block_batch just to exercise the multi-tile grid + ragged-tile masking path.
    probs = actor_forward(state, params, block_batch=16)
    jax.block_until_ready(probs)

    ref = actor_reference(state, params)

    # sanity: valid probability distribution per row, matches reference
    assert probs.shape == (batch, action_size)
    assert bool(jnp.all(jnp.isfinite(probs)))
    assert bool(jnp.all(probs >= 0.0))
    assert bool(jnp.allclose(jnp.sum(probs, axis=-1), 1.0, atol=1e-3))
    assert bool(jnp.allclose(probs, ref, atol=2e-3, rtol=2e-3))

    print("KERNEL_OK")
</pallas_src>

<mosaic_0001>
module attributes {stable_mosaic.version = 11 : i64} {
  func.func @actor_kernel(%arg0: i32, %arg1: memref<16x32xf32, #tpu.memory_space<vmem>>, %arg2: memref<32x20xf32, #tpu.memory_space<vmem>>, %arg3: memref<1x20xf32, #tpu.memory_space<vmem>>, %arg4: memref<20x10xf32, #tpu.memory_space<vmem>>, %arg5: memref<1x10xf32, #tpu.memory_space<vmem>>, %arg6: memref<10x6xf32, #tpu.memory_space<vmem>>, %arg7: memref<1x6xf32, #tpu.memory_space<vmem>>, %arg8: memref<16x6xf32, #tpu.memory_space<vmem>>) attributes {dimension_semantics = [#tpu.dimension_semantics<parallel>], iteration_bounds = array<i64: 3>, scalar_prefetch = 0 : i64, scratch_operands = 0 : i64, tpu.core_type = #tpu.core_type<tc>, window_params = [{transform_indices = @transform_0, window_bounds = array<i64: 16, 32>}, {pipeline_mode = #tpu.pipeline_mode<synchronous>, transform_indices = @transform_1, window_bounds = array<i64: 32, 20>}, {pipeline_mode = #tpu.pipeline_mode<synchronous>, transform_indices = @transform_2, window_bounds = array<i64: 1, 20>}, {pipeline_mode = #tpu.pipeline_mode<synchronous>, transform_indices = @transform_3, window_bounds = array<i64: 20, 10>}, {pipeline_mode = #tpu.pipeline_mode<synchronous>, transform_indices = @transform_4, window_bounds = array<i64: 1, 10>}, {pipeline_mode = #tpu.pipeline_mode<synchronous>, transform_indices = @transform_5, window_bounds = array<i64: 10, 6>}, {pipeline_mode = #tpu.pipeline_mode<synchronous>, transform_indices = @transform_6, window_bounds = array<i64: 1, 6>}, {transform_indices = @transform_7, window_bounds = array<i64: 16, 6>}]} {
    %c0 = arith.constant 0 : index
    %c0_0 = arith.constant 0 : index
    %0 = vector.load %arg1[%c0, %c0_0] : memref<16x32xf32, #tpu.memory_space<vmem>>, vector<16x32xf32>
    %c0_1 = arith.constant 0 : index
    %c0_2 = arith.constant 0 : index
    %1 = vector.load %arg2[%c0_1, %c0_2] : memref<32x20xf32, #tpu.memory_space<vmem>>, vector<32x20xf32>
    %cst = arith.constant dense<0.000000e+00> : vector<16x20xf32>
    %2 = tpu.matmul %0, %1, %cst {dimension_numbers = #tpu.dot_dimension_numbers<[1], [0], [0], [1], [0, 0, 1, 1], [], []>} : vector<16x32xf32>, vector<32x20xf32>, vector<16x20xf32> -> vector<16x20xf32>
    %c0_3 = arith.constant 0 : index
    %c0_4 = arith.constant 0 : index
    %3 = vector.load %arg3[%c0_3, %c0_4] : memref<1x20xf32, #tpu.memory_space<vmem>>, vector<1x20xf32>
    %4 = vector.broadcast %3 : vector<1x20xf32> to vector<16x20xf32>
    %5 = arith.addf %2, %4 : vector<16x20xf32>
    %cst_5 = arith.constant 0.000000e+00 : f32
    %6 = vector.broadcast %cst_5 : f32 to vector<16x20xf32>
    %7 = arith.maximumf %5, %6 : vector<16x20xf32>
    %c0_6 = arith.constant 0 : index
    %c0_7 = arith.constant 0 : index
    %8 = vector.load %arg4[%c0_6, %c0_7] : memref<20x10xf32, #tpu.memory_space<vmem>>, vector<20x10xf32>
    %cst_8 = arith.constant dense<0.000000e+00> : vector<16x10xf32>
    %9 = tpu.matmul %7, %8, %cst_8 {dimension_numbers = #tpu.dot_dimension_numbers<[1], [0], [0], [1], [0, 0, 1, 1], [], []>} : vector<16x20xf32>, vector<20x10xf32>, vector<16x10xf32> -> vector<16x10xf32>
    %c0_9 = arith.constant 0 : index
    %c0_10 = arith.constant 0 : index
    %10 = vector.load %arg5[%c0_9, %c0_10] : memref<1x10xf32, #tpu.memory_space<vmem>>, vector<1x10xf32>
    %11 = vector.broadcast %10 : vector<1x10xf32> to vector<16x10xf32>
    %12 = arith.addf %9, %11 : vector<16x10xf32>
    %cst_11 = arith.constant 0.000000e+00 : f32
    %13 = vector.broadcast %cst_11 : f32 to vector<16x10xf32>
    %14 = arith.maximumf %12, %13 : vector<16x10xf32>
    %c0_12 = arith.constant 0 : index
    %c0_13 = arith.constant 0 : index
    %15 = vector.load %arg6[%c0_12, %c0_13] : memref<10x6xf32, #tpu.memory_space<vmem>>, vector<10x6xf32>
    %cst_14 = arith.constant dense<0.000000e+00> : vector<16x6xf32>
    %16 = tpu.matmul %14, %15, %cst_14 {dimension_numbers = #tpu.dot_dimension_numbers<[1], [0], [0], [1], [0, 0, 1, 1], [], []>} : vector<16x10xf32>, vector<10x6xf32>, vector<16x6xf32> -> vector<16x6xf32>
    %c0_15 = arith.constant 0 : index
    %c0_16 = arith.constant 0 : index
    %17 = vector.load %arg7[%c0_15, %c0_16] : memref<1x6xf32, #tpu.memory_space<vmem>>, vector<1x6xf32>
    %18 = vector.broadcast %17 : vector<1x6xf32> to vector<16x6xf32>
    %19 = arith.addf %16, %18 : vector<16x6xf32>
    %cst_17 = arith.constant dense<0xFF800000> : vector<16xf32>
    %20 = vector.multi_reduction <maximumf>, %19, %cst_17 [1] : vector<16x6xf32> to vector<16xf32>
    %21 = vector.shape_cast %20 : vector<16xf32> to vector<16x1xf32>
    %22 = vector.broadcast %21 : vector<16x1xf32> to vector<16x6xf32>
    %23 = arith.subf %19, %22 : vector<16x6xf32>
    %24 = math.exp %23 : vector<16x6xf32>
    %cst_18 = arith.constant dense<0.000000e+00> : vector<16xf32>
    %25 = vector.multi_reduction <add>, %24, %cst_18 [1] : vector<16x6xf32> to vector<16xf32>
    %26 = vector.shape_cast %25 : vector<16xf32> to vector<16x1xf32>
    %27 = vector.broadcast %26 : vector<16x1xf32> to vector<16x6xf32>
    %28 = arith.divf %24, %27 : vector<16x6xf32>
    %c0_19 = arith.constant 0 : index
    %c0_20 = arith.constant 0 : index
    %29 = vector.load %arg8[%c0_19, %c0_20] : memref<16x6xf32, #tpu.memory_space<vmem>>, vector<16x6xf32>
    tpu.vector_store %arg8[%c0_19, %c0_20], %28 {strides = array<i32>} : memref<16x6xf32, #tpu.memory_space<vmem>>, vector<16x6xf32>,
    return
  }
  func.func @transform_0(%arg0: i32) -> (i32, i32) {
    %c0_i32 = arith.constant 0 : i32
    %c0_i32_0 = arith.constant 0 : i32
    return %arg0, %c0_i32 : i32, i32
  }
  func.func @transform_1(%arg0: i32) -> (i32, i32) {
    %c0_i32 = arith.constant 0 : i32
    %c0_i32_0 = arith.constant 0 : i32
    %c0_i32_1 = arith.constant 0 : i32
    return %c0_i32, %c0_i32_0 : i32, i32
  }
  func.func @transform_2(%arg0: i32) -> (i32, i32) {
    %c0_i32 = arith.constant 0 : i32
    %c0_i32_0 = arith.constant 0 : i32
    %c0_i32_1 = arith.constant 0 : i32
    return %c0_i32, %c0_i32_0 : i32, i32
  }
  func.func @transform_3(%arg0: i32) -> (i32, i32) {
    %c0_i32 = arith.constant 0 : i32
    %c0_i32_0 = arith.constant 0 : i32
    %c0_i32_1 = arith.constant 0 : i32
    return %c0_i32, %c0_i32_0 : i32, i32
  }
  func.func @transform_4(%arg0: i32) -> (i32, i32) {
    %c0_i32 = arith.constant 0 : i32
    %c0_i32_0 = arith.constant 0 : i32
    %c0_i32_1 = arith.constant 0 : i32
    return %c0_i32, %c0_i32_0 : i32, i32
  }
  func.func @transform_5(%arg0: i32) -> (i32, i32) {
    %c0_i32 = arith.constant 0 : i32
    %c0_i32_0 = arith.constant 0 : i32
    %c0_i32_1 = arith.constant 0 : i32
    return %c0_i32, %c0_i32_0 : i32, i32
  }
  func.func @transform_6(%arg0: i32) -> (i32, i32) {
    %c0_i32 = arith.constant 0 : i32
    %c0_i32_0 = arith.constant 0 : i32
    %c0_i32_1 = arith.constant 0 : i32
    return %c0_i32, %c0_i32_0 : i32, i32
  }
  func.func @transform_7(%arg0: i32) -> (i32, i32) {
    %c0_i32 = arith.constant 0 : i32
    %c0_i32_0 = arith.constant 0 : i32
    return %arg0, %c0_i32 : i32, i32
  }
}

</mosaic_0001>

<llo_original>
// kernel: tpu_custom_call.1
$region0: #{tpu_custom_call.1}
  #allocation0 [shape = 'u32[]', space=smem, size = 0x4, offset = 0x4, fixed_abs, tag = 'smem constant byte address 0x4 - core index']
  #allocation1 [shape = 'u32[144,128]{1,0:T(1,128)}', space=vmem, size = 0x12000, scoped, tag = 'internal scratch']
  %s0 = inlined_call_operand.vmem [shape: f32[40,32], index: 0, kind: input, shape index: {}]
  %s1 = inlined_call_operand.vmem [shape: f32[32,20], index: 1, kind: input, shape index: {}]
  %s2 = inlined_call_operand.vmem [shape: f32[1,20], index: 2, kind: input, shape index: {}]
  %s3 = inlined_call_operand.vmem [shape: f32[20,10], index: 3, kind: input, shape index: {}]
  %s4 = inlined_call_operand.vmem [shape: f32[1,10], index: 4, kind: input, shape index: {}]
  %s5 = inlined_call_operand.vmem [shape: f32[10,6], index: 5, kind: input, shape index: {}]
  %s6 = inlined_call_operand.vmem [shape: f32[1,6], index: 6, kind: input, shape index: {}]
  %s7 = inlined_call_operand.vmem [shape: f32[40,6], index: 7, kind: output, shape index: {}]
  %s8 = sld [smem:[#allocation0]]
  $region109: #{tpu_custom_call.1} parent=0
    _
  %s10 = ssub.s32 1, %s8
  %s11 = scalar_select 0, %s10, %s8
  $region1: #{tpu_custom_call.1} parent=0
    #allocation2 [shape = 'u8[16384]{0}', space=vmem, size = 0x4000, scoped, tag = 'output window, operand 0']
    loop: start=0, step=1, limit=5
    $region2: #{tpu_custom_call.1} parent=1 // loop_pre_header
      _
    $region3: #{tpu_custom_call.1} parent=1 // loop_header
      %s13 = sphi 0, %s17
      %p14 = scmp.ge.s32.totalorder %s13, 5
      %s23 = sphi 0, %s25
      %s26 = sphi 0, %s23
      %s27 = sphi 0, %s26
      %s43 = sphi 0, %s27
      %s47 = sphi 0, %s47
      %s49 = sphi 0, %s47
      %s50 = sphi 0, %s49
      %s64 = sphi 0, %s50
      %s68 = sphi 0, %s68
      %s70 = sphi 0, %s68
      %s71 = sphi 0, %s70
      %s85 = sphi 0, %s71
      %s89 = sphi 0, %s89
      %s91 = sphi 0, %s89
      %s92 = sphi 0, %s91
      %s106 = sphi 0, %s92
      %s110 = sphi 0, %s110
      %s112 = sphi 0, %s110
      %s113 = sphi 0, %s112
      %s127 = sphi 0, %s113
      %s131 = sphi 0, %s131
      %s133 = sphi 0, %s131
      %s134 = sphi 0, %s133
      %s148 = sphi 0, %s134
      %s152 = sphi 0, %s152
      %s154 = sphi 0, %s152
      %s155 = sphi 0, %s154
      %s169 = sphi 0, %s155
      %s175 = sphi 0, %s177
      %s178 = sphi 0, %s175
      %s179 = sphi 0, %s178
      %s195 = sphi 0, %s179
    $region4: #{tpu_custom_call.1} parent=1 // loop_header_branch
      %16 = sbr.rel (%p14) target = $region8
    $region5: #{tpu_custom_call.1} parent=1 // loop_body
      %s18 = ssub.s32 %s13, 1
      %s19 = ssub.s32 %s13, 2
      %s20 = sadd.s32 %s13, 1
      %s21 = ssub.s32 %s13, %s20
      %p22 = scmp.eq.s32.totalorder %s21, 0
      %s24 = sadd.s32 %s23, 1
      %s25 = scalar_select %p22, %s23, %s24
      %p28 = pneg %p22
      %p29 = scmp.eq.s32.totalorder %s13, 2
      %p30 = por %p28, %p29
      %p31 = scmp.ne.s32.totalorder %s23, %s26
      %p32 = scmp.eq.s32.totalorder %s13, 0
      %p33 = por %p31, %p32
      %p34 = scmp.ne.s32.totalorder %s23, %s26
      %p35 = scmp.eq.s32.totalorder %s18, 2
      %p36 = por %p34, %p35
      %p37 = scmp.ne.s32.totalorder %s26, %s27
      %p38 = scmp.eq.s32.totalorder %s18, 0
      %p39 = por %p37, %p38
      %p40 = scmp.ne.s32.totalorder %s26, %s27
      %p41 = scmp.eq.s32.totalorder %s19, 2
      %p42 = por %p40, %p41
      %p44 = scmp.ne.s32.totalorder %s27, %s43
      %p45 = scmp.eq.s32.totalorder %s19, 0
      %p46 = por %p44, %p45
      %s48 = sadd.s32 %s47, 1
      %p51 = scmp.eq.s32.totalorder %s13, 2
      %p52 = scmp.ne.s32.totalorder %s47, %s49
      %p53 = scmp.eq.s32.totalorder %s13, 0
      %p54 = por %p52, %p53
      %p55 = scmp.ne.s32.totalorder %s47, %s49
      %p56 = scmp.eq.s32.totalorder %s18, 2
      %p57 = por %p55, %p56
      %p58 = scmp.ne.s32.totalorder %s49, %s50
      %p59 = scmp.eq.s32.totalorder %s18, 0
      %p60 = por %p58, %p59
      %p61 = scmp.ne.s32.totalorder %s49, %s50
      %p62 = scmp.eq.s32.totalorder %s19, 2
      %p63 = por %p61, %p62
      %p65 = scmp.ne.s32.totalorder %s50, %s64
      %p66 = scmp.eq.s32.totalorder %s19, 0
      %p67 = por %p65, %p66
      %s69 = sadd.s32 %s68, 1
      %p72 = scmp.eq.s32.totalorder %s13, 2
      %p73 = scmp.ne.s32.totalorder %s68, %s70
      %p74 = scmp.eq.s32.totalorder %s13, 0
      %p75 = por %p73, %p74
      %p76 = scmp.ne.s32.totalorder %s68, %s70
      %p77 = scmp.eq.s32.totalorder %s18, 2
      %p78 = por %p76, %p77
      %p79 = scmp.ne.s32.totalorder %s70, %s71
      %p80 = scmp.eq.s32.totalorder %s18, 0
      %p81 = por %p79, %p80
      %p82 = scmp.ne.s32.totalorder %s70, %s71
      %p83 = scmp.eq.s32.totalorder %s19, 2
      %p84 = por %p82, %p83
      %p86 = scmp.ne.s32.totalorder %s71, %s85
      %p87 = scmp.eq.s32.totalorder %s19, 0
      %p88 = por %p86, %p87
      %s90 = sadd.s32 %s89, 1
      %p93 = scmp.eq.s32.totalorder %s13, 2
      %p94 = scmp.ne.s32.totalorder %s89, %s91
      %p95 = scmp.eq.s32.totalorder %s13, 0
      %p96 = por %p94, %p95
      %p97 = scmp.ne.s32.totalorder %s89, %s91
      %p98 = scmp.eq.s32.totalorder %s18, 2
      %p99 = por %p97, %p98
      %p100 = scmp.ne.s32.totalorder %s91, %s92
      %p101 = scmp.eq.s32.totalorder %s18, 0
      %p102 = por %p100, %p101
      %p103 = scmp.ne.s32.totalorder %s91, %s92
      %p104 = scmp.eq.s32.totalorder %s19, 2
      %p105 = por %p103, %p104
      %p107 = scmp.ne.s32.totalorder %s92, %s106
      %p108 = scmp.eq.s32.totalorder %s19, 0
      %p109 = por %p107, %p108
      %s111 = sadd.s32 %s110, 1
      %p114 = scmp.eq.s32.totalorder %s13, 2
      %p115 = scmp.ne.s32.totalorder %s110, %s112
      %p116 = scmp.eq.s32.totalorder %s13, 0
      %p117 = por %p115, %p116
      %p118 = scmp.ne.s32.totalorder %s110, %s112
      %p119 = scmp.eq.s32.totalorder %s18, 2
      %p120 = por %p118, %p119
      %p121 = scmp.ne.s32.totalorder %s112, %s113
      %p122 = scmp.eq.s32.totalorder %s18, 0
      %p123 = por %p121, %p122
      %p124 = scmp.ne.s32.totalorder %s112, %s113
      %p125 = scmp.eq.s32.totalorder %s19, 2
      %p126 = por %p124, %p125
      %p128 = scmp.ne.s32.totalorder %s113, %s127
      %p129 = scmp.eq.s32.totalorder %s19, 0
      %p130 = por %p128, %p129
      %s132 = sadd.s32 %s131, 1
      %p135 = scmp.eq.s32.totalorder %s13, 2
      %p136 = scmp.ne.s32.totalorder %s131, %s133
      %p137 = scmp.eq.s32.totalorder %s13, 0
      %p138 = por %p136, %p137
      %p139 = scmp.ne.s32.totalorder %s131, %s133
      %p140 = scmp.eq.s32.totalorder %s18, 2
      %p141 = por %p139, %p140
      %p142 = scmp.ne.s32.totalorder %s133, %s134
      %p143 = scmp.eq.s32.totalorder %s18, 0
      %p144 = por %p142, %p143
      %p145 = scmp.ne.s32.totalorder %s133, %s134
      %p146 = scmp.eq.s32.totalorder %s19, 2
      %p147 = por %p145, %p146
      %p149 = scmp.ne.s32.totalorder %s134, %s148
      %p150 = scmp.eq.s32.totalorder %s19, 0
      %p151 = por %p149, %p150
      %s153 = sadd.s32 %s152, 1
      %p156 = scmp.eq.s32.totalorder %s13, 2
      %p157 = scmp.ne.s32.totalorder %s152, %s154
      %p158 = scmp.eq.s32.totalorder %s13, 0
      %p159 = por %p157, %p158
      %p160 = scmp.ne.s32.totalorder %s152, %s154
      %p161 = scmp.eq.s32.totalorder %s18, 2
      %p162 = por %p160, %p161
      %p163 = scmp.ne.s32.totalorder %s154, %s155
      %p164 = scmp.eq.s32.totalorder %s18, 0
      %p165 = por %p163, %p164
      %p166 = scmp.ne.s32.totalorder %s154, %s155
      %p167 = scmp.eq.s32.totalorder %s19, 2
      %p168 = por %p166, %p167
      %p170 = scmp.ne.s32.totalorder %s155, %s169
      %p171 = scmp.eq.s32.totalorder %s19, 0
      %p172 = por %p170, %p171
      %s173 = ssub.s32 %s13, %s20
      %p174 = scmp.eq.s32.totalorder %s173, 0
      %s176 = sadd.s32 %s175, 1
      %s177 = scalar_select %p174, %s175, %s176
      %p180 = pneg %p174
      %p181 = scmp.eq.s32.totalorder %s13, 2
      %p182 = por %p180, %p181
      %p183 = scmp.ne.s32.totalorder %s175, %s178
      %p184 = scmp.eq.s32.totalorder %s13, 0
      %p185 = por %p183, %p184
      %p186 = scmp.ne.s32.totalorder %s175, %s178
      %p187 = scmp.eq.s32.totalorder %s18, 2
      %p188 = por %p186, %p187
      %p189 = scmp.ne.s32.totalorder %s178, %s179
      %p190 = scmp.eq.s32.totalorder %s18, 0
      %p191 = por %p189, %p190
      %p192 = scmp.ne.s32.totalorder %s178, %s179
      %p193 = scmp.eq.s32.totalorder %s19, 2
      %p194 = por %p192, %p193
      %p196 = scmp.ne.s32.totalorder %s179, %s195
      %p197 = scmp.eq.s32.totalorder %s19, 0
      %p198 = por %p196, %p197
      %p199 = scmp.le.s32.totalorder 1, %s13
      %p200 = scmp.lt.s32.totalorder %s13, 4
      %p201 = pnand %p199, %p200
      %p202 = pneg %p201
      // Predicated region
      $region9: #{tpu_custom_call.1} parent=5 // pred_check
        _
      $region10: #{tpu_custom_call.1} parent=5 // pred_check_branch
        %204 = sbr.rel (%p201) target = $region12
      $region11: #{tpu_custom_call.1} parent=5 // pred_region
        %s205 = ssub.s32 %s13, 1
        // Predicated region
        $region13: #{tpu_custom_call.1} parent=11 // pred_check
          %p206 = pneg %p60
        $region14: #{tpu_custom_call.1} parent=11 // pred_check_branch
          %208 = sbr.rel (%p206) target = $region16
        $region15: #{tpu_custom_call.1} parent=11 // pred_region
          _
        $region16: #{tpu_custom_call.1} parent=11 // pred_fallthru
          _
        // Predicated region
        $region17: #{tpu_custom_call.1} parent=11 // pred_check
          %p209 = pneg %p81
        $region18: #{tpu_custom_call.1} parent=11 // pred_check_branch
          %211 = sbr.rel (%p209) target = $region20
        $region19: #{tpu_custom_call.1} parent=11 // pred_region
          _
        $region20: #{tpu_custom_call.1} parent=11 // pred_fallthru
          _
        // Predicated region
        $region21: #{tpu_custom_call.1} parent=11 // pred_check
          %p212 = pneg %p102
        $region22: #{tpu_custom_call.1} parent=11 // pred_check_branch
          %214 = sbr.rel (%p212) target = $region24
        $region23: #{tpu_custom_call.1} parent=11 // pred_region
          _
        $region24: #{tpu_custom_call.1} parent=11 // pred_fallthru
          _
        // Predicated region
        $region25: #{tpu_custom_call.1} parent=11 // pred_check
          %p215 = pneg %p123
        $region26: #{tpu_custom_call.1} parent=11 // pred_check_branch
          %217 = sbr.rel (%p215) target = $region28
        $region27: #{tpu_custom_call.1} parent=11 // pred_region
          _
        $region28: #{tpu_custom_call.1} parent=11 // pred_fallthru
          _
        // Predicated region
        $region29: #{tpu_custom_call.1} parent=11 // pred_check
          %p218 = pneg %p144
        $region30: #{tpu_custom_call.1} parent=11 // pred_check_branch
          %220 = sbr.rel (%p218) target = $region32
        $region31: #{tpu_custom_call.1} parent=11 // pred_region
          _
        $region32: #{tpu_custom_call.1} parent=11 // pred_fallthru
          _
        // Predicated region
        $region33: #{tpu_custom_call.1} parent=11 // pred_check
          %p221 = pneg %p165
        $region34: #{tpu_custom_call.1} parent=11 // pred_check_branch
          %223 = sbr.rel (%p221) target = $region36
        $region35: #{tpu_custom_call.1} parent=11 // pred_region
          _
        $region36: #{tpu_custom_call.1} parent=11 // pred_fallthru
          _
      $region12: #{tpu_custom_call.1} parent=5 // pred_fallthru
        _
      %p224 = scmp.lt.s32.totalorder %s13, 3
      // Predicated region
      $region37: #{tpu_custom_call.1} parent=5 // pred_check
        %p225 = pneg %p224
      $region38: #{tpu_custom_call.1} parent=5 // pred_check_branch
        %227 = sbr.rel (%p225) target = $region40
      $region39: #{tpu_custom_call.1} parent=5 // pred_region
        // Predicated region
        $region41: #{tpu_custom_call.1} parent=39 // pred_check
          %p228 = pneg %p33
        $region42: #{tpu_custom_call.1} parent=39 // pred_check_branch
          %230 = sbr.rel (%p228) target = $region44
        $region43: #{tpu_custom_call.1} parent=39 // pred_region
          %s231 = smul.u32 2, %s13
          %s232 = ssub.s32 5, %s231
          %p233 = scmp.lt.s32.totalorder %s232, 2
          %s234 = scalar_select %p233, %s232, 2
          %s235 = smul.u32 128, %s234
          %p236 = scmp.lt.s32.totalorder %s231, 4
          %s237 = scalar_select %p236, %s231, 4
          %s238 = smul.addr %s237, 8
          %s239 = scalar_lea.vmem %s0, %s238
          %s240 = smul.u32 2, %s13
          %s241 = ssub.s32 5, %s240
          %p242 = scmp.lt.s32.totalorder %s241, 2
          %s243 = scalar_select %p242, %s241, 2
          %s244 = smul.u32 128, %s243
        $region44: #{tpu_custom_call.1} parent=39 // pred_fallthru
          _
      $region40: #{tpu_custom_call.1} parent=5 // pred_fallthru
        _
      %p245 = scmp.le.s32.totalorder 1, %s13
      %p246 = scmp.lt.s32.totalorder %s13, 4
      %p247 = pnand %p245, %p246
      %p248 = pneg %p247
      // Predicated region
      $region45: #{tpu_custom_call.1} parent=5 // pred_check
        _
      $region46: #{tpu_custom_call.1} parent=5 // pred_check_branch
        %250 = sbr.rel (%p247) target = $region48
      $region47: #{tpu_custom_call.1} parent=5 // pred_region
        %s251 = ssub.s32 %s13, 1
        %s252 = smul.u32 2, %s18
        %s253 = ssub.s32 5, %s252
        %p254 = scmp.lt.s32.totalorder %s253, 2
        %s255 = scalar_select %p254, %s253, 2
        %s256 = smul.u32 128, %s255
        %p257 = scmp.lt.s32.totalorder %s252, 4
        %s258 = scalar_select %p257, %s252, 4
        %s259 = smul.addr %s258, 8
        %s260 = scalar_lea.vmem %s0, %s259
        %p261 = pneg %p39
        %p262 = pneg %p36
        %p263 = pneg %p60
        %p264 = pneg %p57
        %p265 = pneg %p81
        %p266 = pneg %p78
        %p267 = pneg %p102
        %p268 = pneg %p99
        %p269 = pneg %p123
        %p270 = pneg %p120
        %p271 = pneg %p144
        %p272 = pneg %p141
        %p273 = pneg %p165
        %p274 = pneg %p162
        %p275 = pneg %p191
        %p276 = pneg %p188
        %s277 = sand.u32 %s178, 1
        %s278 = sand.u32 %s178, 1
        %s279 = smul.addr %s278, 16
        %s280 = scalar_lea.vmem [#allocation2], %s279
        %s281 = smul.u32 2, %s18
        %s282 = ssub.s32 5, %s281
        %p283 = scmp.lt.s32.totalorder %s282, 2
        %s284 = scalar_select %p283, %s282, 2
        %s285 = smul.u32 128, %s284
        %p286 = scmp.lt.s32.totalorder %s281, 4
        %s287 = scalar_select %p286, %s281, 4
        %s288 = smul.addr %s287, 8
        %s289 = scalar_lea.vmem %s0, %s288
        %s290 = smul.u32 2, %s18
        %s291 = ssub.s32 5, %s290
        %p292 = scmp.lt.s32.totalorder %s291, 2
        %s293 = scalar_select %p292, %s291, 2
        %s294 = smul.u32 128, %s293
        %s295 = smul.u32 2, %s18
        %s296 = ssub.s32 5, %s295
        %p297 = scmp.lt.s32.totalorder %s296, 2
        %s298 = scalar_select %p297, %s296, 2
        %s299 = smul.u32 128, %s298
        %v300 = vld [vmem:[%s289] sm:$0xff]
        %v301 = vld [vmem:[%s289 + $0x8] sm:$0xff]
        %v302 = vld [vmem:[%s1] sm:$0xff]
        %v303 = vld [vmem:[%s1 + $0x8] sm:$0xff]
        %v304 = vld [vmem:[%s1 + $0x10] sm:$0xff]
        %v305 = vld [vmem:[%s1 + $0x18] sm:$0xff]
        %v306 = vld [vmem:[%s2] sm:$0x1]
        %v308 = vlaneseq
        %v309 = vshrl.u32 %v308, 7
        %v310 = vsub.s32 0, %v309
        %v311 = vrot.slane %v306, %v310
        %vm313 = vcmask 261120
        %v315 = vsel %vm313, %v300, 0
        %v318 = vsel %vm313, %v301, 0
        %320 = vmatprep.subr.mxu0 0.0
        %321 = vmatpush1.msra.mxu0 0.0
        %322 = vmatprep.subr.mxu0 0.0
        %323 = vmatpush1.msra.mxu0 0.0
        %324 = vmatprep.subr.mxu0 0.0
        %325 = vmatpush1.msra.mxu0 0.0
        %326 = vmatprep.subr.mxu0 0.0
        %327 = vmatpush1.msra.mxu0 0.0
        %328 = vmatprep.subr.mxu0 0.0
        %329 = vmatpush1.msra.mxu0 0.0
        %330 = vmatprep.subr.mxu0 0.0
        %331 = vmatpush1.msra.mxu0 0.0
        %332 = vmatprep.subr.mxu0 0.0
        %333 = vmatpush1.msra.mxu0 0.0
        %334 = vmatprep.subr.mxu0 0.0
        %335 = vmatpush1.msra.mxu0 0.0
        %336 = vmatprep.subr.mxu0 0.0
        %337 = vmatpush1.msra.mxu0 0.0
        %338 = vmatprep.subr.mxu0 0.0
        %339 = vmatpush1.msra.mxu0 0.0
        %340 = vmatprep.subr.mxu0 0.0
        %341 = vmatpush1.msra.mxu0 0.0
        %342 = vmatprep.subr.mxu0 0.0
        %343 = vmatpush1.msra.mxu0 0.0
        %344 = vmatprep.subr.mxu0 0.0
        %345 = vmatpush1.msra.mxu0 %v305
        %346 = vmatprep.subr.mxu0 0.0
        %347 = vmatpush1.msra.mxu0 %v304
        %348 = vmatprep.subr.mxu0 0.0
        %349 = vmatpush1.msra.mxu0 %v303
        %350 = vmatprep.subr.mxu0 0.0
        %351 = vmatpush1.msra.mxu0 %v302
        %352 = vmatprep.subr.mxu0 0.0
        %353 = vmatpush2.msra.mxu0 0.0
        %354 = vmatprep.subr.mxu0 0.0
        %355 = vmatpush2.msra.mxu0 0.0
        %356 = vmatprep.subr.mxu0 0.0
        %357 = vmatpush2.msra.mxu0 0.0
        %358 = vmatprep.subr.mxu0 0.0
        %359 = vmatpush2.msra.mxu0 0.0
        %360 = vmatprep.subr.mxu0 0.0
        %361 = vmatpush2.msra.mxu0 0.0
        %362 = vmatprep.subr.mxu0 0.0
        %363 = vmatpush2.msra.mxu0 0.0
        %364 = vmatprep.subr.mxu0 0.0
        %365 = vmatpush2.msra.mxu0 0.0
        %366 = vmatprep.subr.mxu0 0.0
        %367 = vmatpush2.msra.mxu0 0.0
        %368 = vmatprep.subr.mxu0 0.0
        %369 = vmatpush2.msra.mxu0 0.0
        %370 = vmatprep.subr.mxu0 0.0
        %371 = vmatpush2.msra.mxu0 0.0
        %372 = vmatprep.subr.mxu0 0.0
        %373 = vmatpush2.msra.mxu0 0.0
        %374 = vmatprep.subr.mxu0 0.0
        %375 = vmatpush2.msra.mxu0 0.0
        %376 = vmatprep.subr.mxu0 0.0
        %377 = vmatpush2.msra.mxu0 0.0
        %378 = vmatprep.subr.mxu0 0.0
        %379 = vmatpush2.msra.mxu0 0.0
        %380 = vmatprep.subr.mxu0 0.0
        %381 = vmatpush2.msra.mxu0 0.0
        %382 = vmatprep.subr.mxu0 0.0
        %383 = vmatpush2.msra.mxu0 0.0
        %384 = vmatprep.mubr.f32.mxu0 0.0
        %385 = vmatmul.mubr.f32.gmra.mxu0 %v315
        %v386 = vpop.f32.mrf.mxu0
        %v387 = vadd.f32 %v311, %v386
        %v388 = vpop.f32.mrf.mxu0
        %389 = vmatprep.mubr.f32.mxu0 0.0
        %390 = vmatmul.mubr.f32.gmra.mxu0 %v318
        %v391 = vpop.f32.mrf.mxu0
        %v392 = vadd.f32 %v311, %v391
        %v393 = vpop.f32.mrf.mxu0
        %394 = vdwg.mxu0
        %v395 = vmax.f32 %v387, 0.0
        %v396 = vmax.f32 %v392, 0.0
        %v397 = vld [vmem:[%s3] sm:$0xff]
        %v398 = vld [vmem:[%s3 + $0x8] sm:$0xff]
        %v399 = vld [vmem:[%s3 + $0x10] sm:$0xf]
        %v400 = vld [vmem:[%s4] sm:$0x1]
        %v402 = vlaneseq
        %v403 = vshrl.u32 %v402, 7
        %v404 = vsub.s32 0, %v403
        %v405 = vrot.slane %v400, %v404
        %vm407 = vcmask 162816
        %v409 = vsel %vm407, %v395, 0
        %v412 = vsel %vm407, %v396, 0
        %vm414 = vcmask 1043456
        %v416 = vsel %vm414, %v399, 0
        %418 = vmatprep.subr.mxu0 0.0
        %419 = vmatpush1.msra.mxu0 0.0
        %420 = vmatprep.subr.mxu0 0.0
        %421 = vmatpush1.msra.mxu0 0.0
        %422 = vmatprep.subr.mxu0 0.0
        %423 = vmatpush1.msra.mxu0 0.0
        %424 = vmatprep.subr.mxu0 0.0
        %425 = vmatpush1.msra.mxu0 0.0
        %426 = vmatprep.subr.mxu0 0.0
        %427 = vmatpush1.msra.mxu0 0.0
        %428 = vmatprep.subr.mxu0 0.0
        %429 = vmatpush1.msra.mxu0 0.0
        %430 = vmatprep.subr.mxu0 0.0
        %431 = vmatpush1.msra.mxu0 0.0
        %432 = vmatprep.subr.mxu0 0.0
        %433 = vmatpush1.msra.mxu0 0.0
        %434 = vmatprep.subr.mxu0 0.0
        %435 = vmatpush1.msra.mxu0 0.0
        %436 = vmatprep.subr.mxu0 0.0
        %437 = vmatpush1.msra.mxu0 0.0
        %438 = vmatprep.subr.mxu0 0.0
        %439 = vmatpush1.msra.mxu0 0.0
        %440 = vmatprep.subr.mxu0 0.0
        %441 = vmatpush1.msra.mxu0 0.0
        %442 = vmatprep.subr.mxu0 0.0
        %443 = vmatpush1.msra.mxu0 0.0
        %444 = vmatprep.subr.mxu0 0.0
        %445 = vmatpush1.msra.mxu0 %v416
        %446 = vmatprep.subr.mxu0 0.0
        %447 = vmatpush1.msra.mxu0 %v398
        %448 = vmatprep.subr.mxu0 0.0
        %449 = vmatpush1.msra.mxu0 %v397
        %450 = vmatprep.subr.mxu0 0.0
        %451 = vmatpush2.msra.mxu0 0.0
        %452 = vmatprep.subr.mxu0 0.0
        %453 = vmatpush2.msra.mxu0 0.0
        %454 = vmatprep.subr.mxu0 0.0
        %455 = vmatpush2.msra.mxu0 0.0
        %456 = vmatprep.subr.mxu0 0.0
        %457 = vmatpush2.msra.mxu0 0.0
        %458 = vmatprep.subr.mxu0 0.0
        %459 = vmatpush2.msra.mxu0 0.0
        %460 = vmatprep.subr.mxu0 0.0
        %461 = vmatpush2.msra.mxu0 0.0
        %462 = vmatprep.subr.mxu0 0.0
        %463 = vmatpush2.msra.mxu0 0.0
        %464 = vmatprep.subr.mxu0 0.0
        %465 = vmatpush2.msra.mxu0 0.0
        %466 = vmatprep.subr.mxu0 0.0
        %467 = vmatpush2.msra.mxu0 0.0
        %468 = vmatprep.subr.mxu0 0.0
        %469 = vmatpush2.msra.mxu0 0.0
        %470 = vmatprep.subr.mxu0 0.0
        %471 = vmatpush2.msra.mxu0 0.0
        %472 = vmatprep.subr.mxu0 0.0
        %473 = vmatpush2.msra.mxu0 0.0
        %474 = vmatprep.subr.mxu0 0.0
        %475 = vmatpush2.msra.mxu0 0.0
        %476 = vmatprep.subr.mxu0 0.0
        %477 = vmatpush2.msra.mxu0 0.0
        %478 = vmatprep.subr.mxu0 0.0
        %479 = vmatpush2.msra.mxu0 0.0
        %480 = vmatprep.subr.mxu0 0.0
        %481 = vmatpush2.msra.mxu0 0.0
        %482 = vmatprep.mubr.f32.mxu0 0.0
        %483 = vmatmul.mubr.f32.gmra.mxu0 %v409
        %v484 = vpop.f32.mrf.mxu0
        %v485 = vadd.f32 %v405, %v484
        %v486 = vpop.f32.mrf.mxu0
        %487 = vmatprep.mubr.f32.mxu0 0.0
        %488 = vmatmul.mubr.f32.gmra.mxu0 %v412
        %v489 = vpop.f32.mrf.mxu0
        %v490 = vadd.f32 %v405, %v489
        %v491 = vpop.f32.mrf.mxu0
        %492 = vdwg.mxu0
        %v493 = vmax.f32 %v485, 0.0
        %v494 = vmax.f32 %v490, 0.0
        %v495 = vld [vmem:[%s5] sm:$0xff]
        %v496 = vld [vmem:[%s5 + $0x8] sm:$0x3]
        %v497 = vld [vmem:[%s6] sm:$0x1]
        %v499 = vlaneseq
        %v500 = vshrl.u32 %v499, 7
        %v501 = vsub.s32 0, %v500
        %v502 = vrot.slane %v497, %v501
        %vm504 = vcmask 80896
        %v506 = vsel %vm504, %v493, 0
        %v509 = vsel %vm504, %v494, 0
        %vm511 = vcmask 1041408
        %v513 = vsel %vm511, %v496, 0
        %515 = vmatprep.subr.mxu0 0.0
        %516 = vmatpush1.msra.mxu0 0.0
        %517 = vmatprep.subr.mxu0 0.0
        %518 = vmatpush1.msra.mxu0 0.0
        %519 = vmatprep.subr.mxu0 0.0
        %520 = vmatpush1.msra.mxu0 0.0
        %521 = vmatprep.subr.mxu0 0.0
        %522 = vmatpush1.msra.mxu0 0.0
        %523 = vmatprep.subr.mxu0 0.0
        %524 = vmatpush1.msra.mxu0 0.0
        %525 = vmatprep.subr.mxu0 0.0
        %526 = vmatpush1.msra.mxu0 0.0
        %527 = vmatprep.subr.mxu0 0.0
        %528 = vmatpush1.msra.mxu0 0.0
        %529 = vmatprep.subr.mxu0 0.0
        %530 = vmatpush1.msra.mxu0 0.0
        %531 = vmatprep.subr.mxu0 0.0
        %532 = vmatpush1.msra.mxu0 0.0
        %533 = vmatprep.subr.mxu0 0.0
        %534 = vmatpush1.msra.mxu0 0.0
        %535 = vmatprep.subr.mxu0 0.0
        %536 = vmatpush1.msra.mxu0 0.0
        %537 = vmatprep.subr.mxu0 0.0
        %538 = vmatpush1.msra.mxu0 0.0
        %539 = vmatprep.subr.mxu0 0.0
        %540 = vmatpush1.msra.mxu0 0.0
        %541 = vmatprep.subr.mxu0 0.0
        %542 = vmatpush1.msra.mxu0 0.0
        %543 = vmatprep.subr.mxu0 0.0
        %544 = vmatpush1.msra.mxu0 %v513
        %545 = vmatprep.subr.mxu0 0.0
        %546 = vmatpush1.msra.mxu0 %v495
        %547 = vmatprep.subr.mxu0 0.0
        %548 = vmatpush2.msra.mxu0 0.0
        %549 = vmatprep.subr.mxu0 0.0
        %550 = vmatpush2.msra.mxu0 0.0
        %551 = vmatprep.subr.mxu0 0.0
        %552 = vmatpush2.msra.mxu0 0.0
        %553 = vmatprep.subr.mxu0 0.0
        %554 = vmatpush2.msra.mxu0 0.0
        %555 = vmatprep.subr.mxu0 0.0
        %556 = vmatpush2.msra.mxu0 0.0
        %557 = vmatprep.subr.mxu0 0.0
        %558 = vmatpush2.msra.mxu0 0.0
        %559 = vmatprep.subr.mxu0 0.0
        %560 = vmatpush2.msra.mxu0 0.0
        %561 = vmatprep.subr.mxu0 0.0
        %562 = vmatpush2.msra.mxu0 0.0
        %563 = vmatprep.subr.mxu0 0.0
        %564 = vmatpush2.msra.mxu0 0.0
        %565 = vmatprep.subr.mxu0 0.0
        %566 = vmatpush2.msra.mxu0 0.0
        %567 = vmatprep.subr.mxu0 0.0
        %568 = vmatpush2.msra.mxu0 0.0
        %569 = vmatprep.subr.mxu0 0.0
        %570 = vmatpush2.msra.mxu0 0.0
        %571 = vmatprep.subr.mxu0 0.0
        %572 = vmatpush2.msra.mxu0 0.0
        %573 = vmatprep.subr.mxu0 0.0
        %574 = vmatpush2.msra.mxu0 0.0
        %575 = vmatprep.subr.mxu0 0.0
        %576 = vmatpush2.msra.mxu0 0.0
        %577 = vmatprep.subr.mxu0 0.0
        %578 = vmatpush2.msra.mxu0 0.0
        %579 = vmatprep.mubr.f32.mxu0 0.0
        %580 = vmatmul.mubr.f32.gmra.mxu0 %v506
        %v581 = vpop.f32.mrf.mxu0
        %v582 = vadd.f32 %v502, %v581
        %v583 = vpop.f32.mrf.mxu0
        %584 = vmatprep.mubr.f32.mxu0 0.0
        %585 = vmatmul.mubr.f32.gmra.mxu0 %v509
        %v586 = vpop.f32.mrf.mxu0
        %v587 = vadd.f32 %v502, %v586
        %v588 = vpop.f32.mrf.mxu0
        %589 = vdwg.mxu0
        %vm590 = vcmask 48128
        %v591 = vsel %vm590, %v582, -inf
        %592 = vmax.xlane.f32.xlu0 %v591
        %v593 = vpop.xlane.xlu0 %592
        %v594 = vsel %vm590, %v587, -inf
        %595 = vmax.xlane.f32.xlu0 %v594
        %v596 = vpop.xlane.xlu0 %595
        %v597 = vsub.f32 %v582, %v593
        %v598 = vsub.f32 %v587, %v596
        %v599 = vmul.f32 %v597, 1.442695
        %v600 = vpow.pop %v599
        %v601 = vmul.f32 %v598, 1.442695
        %v602 = vpow.pop %v601
        %v603 = vsel %vm590, %v600, 0.0
        %604 = vadd.xlane.f32.xlu0 %v603
        %v605 = vpop.xlane.xlu0 %604
        %v606 = vsel %vm590, %v602, 0.0
        %607 = vadd.xlane.f32.xlu0 %v606
        %v608 = vpop.xlane.xlu0 %607
        %v609 = vrcp.pop %v605
        %v610 = vmul.f32 %v600, %v609
        %v611 = vrcp.pop %v608
        %v612 = vmul.f32 %v602, %v611
        %613 = vst.msk [vmem:[%s280] sm:$0xff] %vm590, %v610
        %614 = vst.msk [vmem:[%s280 + $0x8] sm:$0xff] %vm590, %v612
        %s615 = sand.u32 %s178, 1
        %s616 = sand.u32 %s178, 1
        %s617 = smul.addr %s616, 16
        %s618 = scalar_lea.vmem [#allocation2], %s617
        // Predicated region
        $region49: #{tpu_custom_call.1} parent=47 // pred_check
          %p619 = pneg %p188
        $region50: #{tpu_custom_call.1} parent=47 // pred_check_branch
          %621 = sbr.rel (%p619) target = $region52
        $region51: #{tpu_custom_call.1} parent=47 // pred_region
          %s622 = smul.u32 2, %s18
          %s623 = ssub.s32 5, %s622
          %p624 = scmp.lt.s32.totalorder %s623, 2
          %s625 = scalar_select %p624, %s623, 2
          %s626 = smul.u32 128, %s625
          %p627 = scmp.ne.s32.totalorder 0, %s626
          %s628 = smul.addr %s622, 8
          %s629 = scalar_lea.vmem %s7, %s628
          // Predicated region
          $region53: #{tpu_custom_call.1} parent=51 // pred_check
            %p630 = pneg %p627
          $region54: #{tpu_custom_call.1} parent=51 // pred_check_branch
            %632 = sbr.rel (%p630) target = $region56
          $region55: #{tpu_custom_call.1} parent=51 // pred_region
            // Predicated region
            $region57: #{tpu_custom_call.1} parent=55 // pred_check
              _
            $region58: #{tpu_custom_call.1} parent=55 // pred_check_branch
              %634 = sbr.rel (0) target = $region60
            $region59: #{tpu_custom_call.1} parent=55 // pred_region
              // Predicated region
              $region79: #{tpu_custom_call.1} parent=59 // pred_check
                _
              $region80: #{tpu_custom_call.1} parent=59 // pred_check_branch
                %686 = sbr.rel (0) target = $region82
              $region81: #{tpu_custom_call.1} parent=59 // pred_region
                %s687 = sshrl.u32 %s625, 1
                // While loop
                $region83: #{tpu_custom_call.1} parent=81 // loop_pre_header
                  _
                $region84: #{tpu_custom_call.1} parent=81 // loop_header
                  %s689 = sphi 0, %s691
                  %p690 = scmp.ge.s32.totalorder %s689, %s687
                  %s694 = sphi 0, %s703
                  %s695 = sphi %s618, %s706
                  %s696 = sphi %s629, %s707
                $region85: #{tpu_custom_call.1} parent=81 // loop_header_branch
                  %693 = sbr.rel (%p690) target = $region89
                $region86: #{tpu_custom_call.1} parent=81 // loop_body
                  %v697 = vld [vmem:[%s695] sm:$0xff]
                  %698 = vst [vmem:[%s696] sm:$0xff] %v697
                  %v699 = vld [vmem:[%s695 + $0x8] sm:$0xff]
                  %700 = vst [vmem:[%s696 + $0x8] sm:$0xff] %v699
                  %s701 = sadd.s32 1, %s694
                  %p702 = scmp.ge.s32.totalorder %s701, %s687
                  %s703 = scalar_select %p702, 0, %s701
                  %s704 = smul.u32 %s703, 16
                  %s705 = smul.u32 %s703, 16
                  %s706 = scalar_lea.vmem %s618, %s704 [#allocation2]
                  %s707 = scalar_lea.vmem %s629, %s705
                $region87: #{tpu_custom_call.1} parent=81 // loop_footer
                  %s691 = sadd.s32 %s689, 1
                $region88: #{tpu_custom_call.1} parent=81 // loop_footer_branch
                  %688 = sbr.rel target = $region84
                $region89: #{tpu_custom_call.1} parent=81 // loop_exit
                  _
                %s708 = sshrl.u32 %s625, 1
                %s709 = sand.u32 %s625, 1
                %s710 = smul.u32 %s708, 2
                %s711 = smul.u32 8, %s710
                %s712 = scalar_lea.vmem %s618, %s711 [#allocation2]
                %s713 = smul.u32 8, %s710
                %s714 = scalar_lea.vmem %s629, %s713
                // While loop
                $region90: #{tpu_custom_call.1} parent=81 // loop_pre_header
                  _
                $region91: #{tpu_custom_call.1} parent=81 // loop_header
                  %s716 = sphi 0, %s718
                  %p717 = scmp.ge.s32.totalorder %s716, %s709
                  %s721 = sphi 0, %s728
                  %s722 = sphi %s712, %s731
                  %s723 = sphi %s714, %s732
                $region92: #{tpu_custom_call.1} parent=81 // loop_header_branch
                  %720 = sbr.rel (%p717) target = $region96
                $region93: #{tpu_custom_call.1} parent=81 // loop_body
                  %v724 = vld [vmem:[%s722] sm:$0xff]
                  %725 = vst [vmem:[%s723] sm:$0xff] %v724
                  %s726 = sadd.s32 1, %s721
                  %p727 = scmp.ge.s32.totalorder %s726, %s709
                  %s728 = scalar_select %p727, 0, %s726
                  %s729 = smul.u32 %s728, 8
                  %s730 = smul.u32 %s728, 8
                  %s731 = scalar_lea.vmem %s712, %s729 [#allocation2]
                  %s732 = scalar_lea.vmem %s714, %s730
                $region94: #{tpu_custom_call.1} parent=81 // loop_footer
                  %s718 = sadd.s32 %s716, 1
                $region95: #{tpu_custom_call.1} parent=81 // loop_footer_branch
                  %715 = sbr.rel target = $region91
                $region96: #{tpu_custom_call.1} parent=81 // loop_exit
                  _
              $region82: #{tpu_custom_call.1} parent=59 // pred_fallthru
                _
              // Predicated region
              $region97: #{tpu_custom_call.1} parent=59 // pred_check
                _
              $region98: #{tpu_custom_call.1} parent=59 // pred_check_branch
                %734 = sbr.rel target = $region100
              $region99: #{tpu_custom_call.1} parent=59 // pred_region
                _
              $region100: #{tpu_custom_call.1} parent=59 // pred_fallthru
                _
            $region60: #{tpu_custom_call.1} parent=55 // pred_fallthru
              _
            // Predicated region
            $region61: #{tpu_custom_call.1} parent=55 // pred_check
              _
            $region62: #{tpu_custom_call.1} parent=55 // pred_check_branch
              %636 = sbr.rel target = $region64
            $region63: #{tpu_custom_call.1} parent=55 // pred_region
              %s638 = ssub.s32 256, 1
              %s639 = sshrl.u32 %s625, 1
              // While loop
              $region65: #{tpu_custom_call.1} parent=63 // loop_pre_header
                _
              $region66: #{tpu_custom_call.1} parent=63 // loop_header
                %s641 = sphi 0, %s643
                %p642 = scmp.ge.s32.totalorder %s641, %s639
                %s646 = sphi 0, %s655
                %s647 = sphi %s618, %s658
                %s648 = sphi %s629, %s659
              $region67: #{tpu_custom_call.1} parent=63 // loop_header_branch
                %645 = sbr.rel (%p642) target = $region71
              $region68: #{tpu_custom_call.1} parent=63 // loop_body
                %v649 = vld [vmem:[%s647] sm:%s638]
                %650 = vst [vmem:[%s648] sm:%s638] %v649
                %v651 = vld [vmem:[%s647 + $0x8] sm:%s638]
                %652 = vst [vmem:[%s648 + $0x8] sm:%s638] %v651
                %s653 = sadd.s32 1, %s646
                %p654 = scmp.ge.s32.totalorder %s653, %s639
                %s655 = scalar_select %p654, 0, %s653
                %s656 = smul.u32 %s655, 16
                %s657 = smul.u32 %s655, 16
                %s658 = scalar_lea.vmem %s618, %s656 [#allocation2]
                %s659 = scalar_lea.vmem %s629, %s657
              $region69: #{tpu_custom_call.1} parent=63 // loop_footer
                %s643 = sadd.s32 %s641, 1
              $region70: #{tpu_custom_call.1} parent=63 // loop_footer_branch
                %640 = sbr.rel target = $region66
              $region71: #{tpu_custom_call.1} parent=63 // loop_exit
                _
              %s660 = sshrl.u32 %s625, 1
              %s661 = sand.u32 %s625, 1
              %s662 = smul.u32 %s660, 2
              %s663 = smul.u32 8, %s662
              %s664 = scalar_lea.vmem %s618, %s663 [#allocation2]
              %s665 = smul.u32 8, %s662
              %s666 = scalar_lea.vmem %s629, %s665
              // While loop
              $region72: #{tpu_custom_call.1} parent=63 // loop_pre_header
                _
              $region73: #{tpu_custom_call.1} parent=63 // loop_header
                %s668 = sphi 0, %s670
                %p669 = scmp.ge.s32.totalorder %s668, %s661
                %s673 = sphi 0, %s680
                %s674 = sphi %s664, %s683
                %s675 = sphi %s666, %s684
              $region74: #{tpu_custom_call.1} parent=63 // loop_header_branch
                %672 = sbr.rel (%p669) target = $region78
              $region75: #{tpu_custom_call.1} parent=63 // loop_body
                %v676 = vld [vmem:[%s674] sm:%s638]
                %677 = vst [vmem:[%s675] sm:%s638] %v676
                %s678 = sadd.s32 1, %s673
                %p679 = scmp.ge.s32.totalorder %s678, %s661
                %s680 = scalar_select %p679, 0, %s678
                %s681 = smul.u32 %s680, 8
                %s682 = smul.u32 %s680, 8
                %s683 = scalar_lea.vmem %s664, %s681 [#allocation2]
                %s684 = scalar_lea.vmem %s666, %s682
              $region76: #{tpu_custom_call.1} parent=63 // loop_footer
                %s670 = sadd.s32 %s668, 1
              $region77: #{tpu_custom_call.1} parent=63 // loop_footer_branch
                %667 = sbr.rel target = $region73
              $region78: #{tpu_custom_call.1} parent=63 // loop_exit
                _
            $region64: #{tpu_custom_call.1} parent=55 // pred_fallthru
              _
          $region56: #{tpu_custom_call.1} parent=51 // pred_fallthru
            _
          %735 = vnop
        $region52: #{tpu_custom_call.1} parent=47 // pred_fallthru
          _
      $region48: #{tpu_custom_call.1} parent=5 // pred_fallthru
        _
      %p736 = scmp.le.s32.totalorder 2, %s13
      // Predicated region
      $region101: #{tpu_custom_call.1} parent=5 // pred_check
        %p737 = pneg %p736
      $region102: #{tpu_custom_call.1} parent=5 // pred_check_branch
        %739 = sbr.rel (%p737) target = $region104
      $region103: #{tpu_custom_call.1} parent=5 // pred_region
        %s740 = ssub.s32 %s13, 2
        // Predicated region
        $region105: #{tpu_custom_call.1} parent=103 // pred_check
          %p741 = pneg %p194
        $region106: #{tpu_custom_call.1} parent=103 // pred_check_branch
          %743 = sbr.rel (%p741) target = $region108
        $region107: #{tpu_custom_call.1} parent=103 // pred_region
          %s744 = sand.u32 %s179, 1
          %s745 = sand.u32 %s179, 1
          %s746 = smul.addr %s745, 16
          %s747 = scalar_lea.vmem [#allocation2], %s746
        $region108: #{tpu_custom_call.1} parent=103 // pred_fallthru
          _
      $region104: #{tpu_custom_call.1} parent=5 // pred_fallthru
        _
    $region6: #{tpu_custom_call.1} parent=1 // loop_footer
      %s17 = sadd.s32 1, %s13
    $region7: #{tpu_custom_call.1} parent=1 // loop_footer_branch
      %12 = sbr.rel target = $region3
    $region8: #{tpu_custom_call.1} parent=1 // loop_exit
      _

</llo_original>
